<compile_context>
chip_gen: v7x
topology: tpu7x:2x2x1
jax: 0.10.0
libtpu: 0.0.40
codegen_flags: <defaults>
</compile_context>

<pallas_src>
import jax
import jax.numpy as jnp
from jax import lax
from jax.experimental import pallas as pl
from jax.experimental.pallas import tpu as pltpu


def _round_up(n, m):
    return ((n + m - 1) // m) * m


def _routing_kernel(x_ref, w_ref, b_ref, o_ref):
    # x_ref: (TM, C) per-sample flattened features (one batch tile)
    # w_ref: (E, C)  weight in native nn.Linear layout
    # b_ref: (1, E)  bias, lane-major
    # o_ref: (TM, E) lane-major routing weights
    x = x_ref[...].astype(jnp.float32)
    w = w_ref[...].astype(jnp.float32)
    b = b_ref[...].astype(jnp.float32)

    # MXU matmul contracting over C: (TM, C) x (E, C)^T -> (TM, E), f32 acc.
    logits = lax.dot_general(
        x, w,
        dimension_numbers=(((1,), (1,)), ((), ())),
        preferred_element_type=jnp.float32,
    ) + b

    # sigmoid(z) = 1 / (1 + exp(-z)); exp + reciprocal both go to the EUP slot.
    o_ref[...] = pl.reciprocal(1.0 + jnp.exp(-logits), approx=True).astype(o_ref.dtype)


def routing_forward(x, weight, bias, *, block_m=128):
    """CondConv `_routing` forward.

    Per-sample semantics match the PyTorch module:
        flatten -> dropout (eval: identity) -> Linear(C, E) -> sigmoid

    x: either a single sample with prod(shape) == in_channels (returns (E,))
       or a batch (B, ...) whose trailing dims flatten to in_channels per
       sample (returns (B, E)) — batching amortizes the pallas_call overhead.
    weight: (num_experts, in_channels) as in nn.Linear. bias: (num_experts,).
    """
    num_experts, in_channels = weight.shape

    # TODO(synk): nn.Dropout is identity in eval mode; training-mode dropout
    # (random masking + 1/(1-p) scaling) is not implemented here.

    single = (x.size == in_channels)
    if single:
        x2 = jnp.reshape(x, (1, in_channels))          # torch.flatten(x) as a row
    else:
        x2 = jnp.reshape(x, (x.shape[0], in_channels))  # per-sample flatten
    b_rows = x2.shape[0]

    # Sublane-friendly batch tile; tall tiles feed the MXU when B is large.
    tile_m = min(block_m, _round_up(b_rows, 8))
    padded = _round_up(b_rows, tile_m)
    if padded != b_rows:
        x2 = jnp.pad(x2, ((0, padded - b_rows), (0, 0)))

    bias2 = jnp.reshape(bias, (1, num_experts))         # lane-major, contiguous reshape

    out = pl.pallas_call(
        _routing_kernel,
        out_shape=jax.ShapeDtypeStruct((padded, num_experts), jnp.float32),
        grid=(padded // tile_m,),
        in_specs=[
            pl.BlockSpec((tile_m, in_channels), lambda i: (i, 0)),
            pl.BlockSpec((num_experts, in_channels), lambda i: (0, 0)),
            pl.BlockSpec((1, num_experts), lambda i: (0, 0)),
        ],
        out_specs=pl.BlockSpec((tile_m, num_experts), lambda i: (i, 0)),
        compiler_params=pltpu.CompilerParams(
            dimension_semantics=("parallel",),
        ),
    )(x2, weight, bias2)

    out = out[:b_rows]
    if single:
        return jnp.reshape(out, (num_experts,))
    return out


if __name__ == "__main__":
    # Module config (synthetic, deterministic init).
    in_channels = 64
    num_experts = 8
    dropout_rate = 0.2  # unused at inference (eval-mode dropout == identity)
    batch = 8

    key = jax.random.PRNGKey(0)
    kx, kxb, kw, kb = jax.random.split(key, 4)

    # nn.Linear-style deterministic init: U(-1/sqrt(C), 1/sqrt(C)).
    bound = 1.0 / jnp.sqrt(jnp.float32(in_channels))
    weight = jax.random.uniform(
        kw, (num_experts, in_channels), minval=-bound, maxval=bound,
        dtype=jnp.float32)
    bias = jax.random.uniform(
        kb, (num_experts,), minval=-bound, maxval=bound, dtype=jnp.float32)

    # 1) Original single-sample semantics: pooled features NCHW (1, C, 1, 1),
    #    torch.flatten(x) -> (C,).
    x_single = jax.random.normal(kx, (1, in_channels, 1, 1), dtype=jnp.float32)
    out_single = jax.block_until_ready(routing_forward(x_single, weight, bias))
    ref_single = jax.nn.sigmoid(jnp.reshape(x_single, (-1,)) @ weight.T + bias)
    assert out_single.shape == (num_experts,)
    assert jnp.allclose(out_single, ref_single, atol=2e-3, rtol=2e-3)

    # 2) Batched variant (per-sample flatten), amortizing call overhead.
    x_batch = jax.random.normal(kxb, (batch, in_channels, 1, 1), dtype=jnp.float32)
    out_batch = jax.block_until_ready(routing_forward(x_batch, weight, bias))
    ref_batch = jax.nn.sigmoid(
        jnp.reshape(x_batch, (batch, in_channels)) @ weight.T + bias)
    assert out_batch.shape == (batch, num_experts)
    assert jnp.allclose(out_batch, ref_batch, atol=2e-3, rtol=2e-3)

    print("KERNEL_OK")
</pallas_src>

<mosaic_0001>
module attributes {stable_mosaic.version = 11 : i64} {
  func.func @_routing_kernel(%arg0: i32, %arg1: memref<8x64xf32, #tpu.memory_space<vmem>>, %arg2: memref<8x64xf32, #tpu.memory_space<vmem>>, %arg3: memref<1x8xf32, #tpu.memory_space<vmem>>, %arg4: memref<8x8xf32, #tpu.memory_space<vmem>>) attributes {dimension_semantics = [#tpu.dimension_semantics<parallel>], iteration_bounds = array<i64: 1>, scalar_prefetch = 0 : i64, scratch_operands = 0 : i64, tpu.core_type = #tpu.core_type<tc>, window_params = [{transform_indices = @transform_0, window_bounds = array<i64: 8, 64>}, {pipeline_mode = #tpu.pipeline_mode<synchronous>, transform_indices = @transform_1, window_bounds = array<i64: 8, 64>}, {pipeline_mode = #tpu.pipeline_mode<synchronous>, transform_indices = @transform_2, window_bounds = array<i64: 1, 8>}, {transform_indices = @transform_3, window_bounds = array<i64: 8, 8>}]} {
    %c0 = arith.constant 0 : index
    %c0_0 = arith.constant 0 : index
    %0 = vector.load %arg1[%c0, %c0_0] : memref<8x64xf32, #tpu.memory_space<vmem>>, vector<8x64xf32>
    %c0_1 = arith.constant 0 : index
    %c0_2 = arith.constant 0 : index
    %1 = vector.load %arg2[%c0_1, %c0_2] : memref<8x64xf32, #tpu.memory_space<vmem>>, vector<8x64xf32>
    %c0_3 = arith.constant 0 : index
    %c0_4 = arith.constant 0 : index
    %2 = vector.load %arg3[%c0_3, %c0_4] : memref<1x8xf32, #tpu.memory_space<vmem>>, vector<1x8xf32>
    %cst = arith.constant dense<0.000000e+00> : vector<8x8xf32>
    %3 = tpu.matmul %0, %1, %cst {dimension_numbers = #tpu.dot_dimension_numbers<[1], [1], [0], [0], [0, 0, 1, 0], [], []>} : vector<8x64xf32>, vector<8x64xf32>, vector<8x8xf32> -> vector<8x8xf32>
    %4 = vector.broadcast %2 : vector<1x8xf32> to vector<8x8xf32>
    %5 = arith.addf %3, %4 : vector<8x8xf32>
    %cst_5 = arith.constant 0.000000e+00 : f32
    %6 = vector.broadcast %cst_5 : f32 to vector<8x8xf32>
    %7 = arith.subf %6, %5 : vector<8x8xf32>
    %8 = math.exp %7 : vector<8x8xf32>
    %cst_6 = arith.constant 1.000000e+00 : f32
    %9 = vector.broadcast %cst_6 : f32 to vector<8x8xf32>
    %10 = arith.addf %9, %8 : vector<8x8xf32>
    %11 = tpu.reciprocal %10 {approx = true} : vector<8x8xf32> -> vector<8x8xf32>
    %c0_7 = arith.constant 0 : index
    %c0_8 = arith.constant 0 : index
    %12 = vector.load %arg4[%c0_7, %c0_8] : memref<8x8xf32, #tpu.memory_space<vmem>>, vector<8x8xf32>
    tpu.vector_store %arg4[%c0_7, %c0_8], %11 {strides = array<i32>} : memref<8x8xf32, #tpu.memory_space<vmem>>, vector<8x8xf32>,
    return
  }
  func.func @transform_0(%arg0: i32) -> (i32, i32) {
    %c0_i32 = arith.constant 0 : i32
    %c0_i32_0 = arith.constant 0 : i32
    return %arg0, %c0_i32 : i32, i32
  }
  func.func @transform_1(%arg0: i32) -> (i32, i32) {
    %c0_i32 = arith.constant 0 : i32
    %c0_i32_0 = arith.constant 0 : i32
    %c0_i32_1 = arith.constant 0 : i32
    return %c0_i32, %c0_i32_0 : i32, i32
  }
  func.func @transform_2(%arg0: i32) -> (i32, i32) {
    %c0_i32 = arith.constant 0 : i32
    %c0_i32_0 = arith.constant 0 : i32
    %c0_i32_1 = arith.constant 0 : i32
    return %c0_i32, %c0_i32_0 : i32, i32
  }
  func.func @transform_3(%arg0: i32) -> (i32, i32) {
    %c0_i32 = arith.constant 0 : i32
    %c0_i32_0 = arith.constant 0 : i32
    return %arg0, %c0_i32 : i32, i32
  }
}

</mosaic_0001>

<llo_original>
// kernel: tpu_custom_call.1
$region0: #{tpu_custom_call.1}
  #allocation0 [shape = 'u32[]', space=smem, size = 0x4, offset = 0x4, fixed_abs, tag = 'smem constant byte address 0x4 - core index']
  #allocation1 [shape = 'u32[144,128]{1,0:T(1,128)}', space=vmem, size = 0x12000, scoped, tag = 'internal scratch']
  %s0 = inlined_call_operand.hbm [shape: f32[8,64], index: 0, kind: input, shape index: {}]
  %s1 = inlined_call_operand.hbm [shape: f32[8,64], index: 1, kind: input, shape index: {}]
  %s2 = inlined_call_operand.vmem [shape: f32[1,8], index: 2, kind: input, shape index: {}]
  %s3 = inlined_call_operand.hbm [shape: f32[8,8], index: 3, kind: output, shape index: {}]
  %s4 = sld [smem:[#allocation0]]
  $region30: #{tpu_custom_call.1} parent=0
    _
  %s6 = ssub.s32 1, %s4
  %s7 = scalar_select 0, %s6, %s4
  $region1: #{tpu_custom_call.1} parent=0
    #allocation2 [shape = 'u8[4096]{0}', space=vmem, size = 0x1000, scoped, tag = 'input window, operand 0, single buffered']
    #allocation3 [shape = 's32[1]{0}', space=sflag, size = 0x4, scoped, tag = 'scoped memory for tpu_custom_call.1']
    #allocation4 [shape = 's32[1]{0}', space=sflag, size = 0x4, scoped, tag = 'scoped memory for tpu_custom_call.1']
    #allocation5 [shape = 'u8[4096]{0}', space=vmem, size = 0x1000, scoped, tag = 'input window, operand 1, single buffered']
    #allocation6 [shape = 's32[1]{0}', space=sflag, size = 0x4, scoped, tag = 'scoped memory for tpu_custom_call.1']
    #allocation7 [shape = 'u8[4096]{0}', space=vmem, size = 0x1000, scoped, tag = 'output window, operand 0, single buffered']
    %8 = vsyncpa [#allocation3], 0
    %9 = vsyncpa [#allocation6], 0
    %10 = vsyncpa [#allocation4], 0
    // Predicated region
    $region2: #{tpu_custom_call.1} parent=1 // pred_check
      _
    $region3: #{tpu_custom_call.1} parent=1 // pred_check_branch
      %12 = sbr.rel (0) target = $region5
    $region4: #{tpu_custom_call.1} parent=1 // pred_region
      %s14 = ssub.s32 128, 128
      %15 = vsyncadd [#allocation3], %s14
      %s17 = sshll.u32 [#allocation2], 4
      %s18 = int_to_ptr.vmem [resolvable:$true] %s17
      %20 = dma.hbm_to_vmem [thread:$0]  %s0, 128, %s18, [#allocation3]
    $region5: #{tpu_custom_call.1} parent=1 // pred_fallthru
      _
    // Predicated region
    $region6: #{tpu_custom_call.1} parent=1 // pred_check
      _
    $region7: #{tpu_custom_call.1} parent=1 // pred_check_branch
      %22 = sbr.rel (0) target = $region9
    $region8: #{tpu_custom_call.1} parent=1 // pred_region
      %s24 = ssub.s32 128, 128
      %25 = vsyncadd [#allocation6], %s24
      %s27 = sshll.u32 [#allocation5], 4
      %s28 = int_to_ptr.vmem [resolvable:$true] %s27
      %30 = dma.hbm_to_vmem [thread:$0]  %s1, 128, %s28, [#allocation6]
    $region9: #{tpu_custom_call.1} parent=1 // pred_fallthru
      _
    // Predicated region
    $region10: #{tpu_custom_call.1} parent=1 // pred_check
      _
    $region11: #{tpu_custom_call.1} parent=1 // pred_check_branch
      %32 = sbr.rel (0) target = $region13
    $region12: #{tpu_custom_call.1} parent=1 // pred_region
      _
    $region13: #{tpu_custom_call.1} parent=1 // pred_fallthru
      _
    // Predicated region
    $region14: #{tpu_custom_call.1} parent=1 // pred_check
      _
    $region15: #{tpu_custom_call.1} parent=1 // pred_check_branch
      %34 = sbr.rel (0) target = $region17
    $region16: #{tpu_custom_call.1} parent=1 // pred_region
      %35 = dma.done [#allocation3], 128
    $region17: #{tpu_custom_call.1} parent=1 // pred_fallthru
      _
    // Predicated region
    $region18: #{tpu_custom_call.1} parent=1 // pred_check
      _
    $region19: #{tpu_custom_call.1} parent=1 // pred_check_branch
      %37 = sbr.rel (0) target = $region21
    $region20: #{tpu_custom_call.1} parent=1 // pred_region
      %38 = dma.done [#allocation6], 128
    $region21: #{tpu_custom_call.1} parent=1 // pred_fallthru
      _
    %v39 = vld [vmem:[#allocation2] sm:$0xff]
    %v40 = vld [vmem:[#allocation5] sm:$0xff]
    %v41 = vld [vmem:[%s2] sm:$0x1]
    %v43 = vlaneseq
    %v44 = vshrl.u32 %v43, 7
    %v45 = vsub.s32 0, %v44
    %v46 = vrot.slane %v41, %v45
    %vm48 = vcmask 523264
    %v50 = vsel %vm48, %v39, 0
    %v53 = vsel %vm48, %v40, 0
    %55 = vmatprep.subr.mxu0 0.0
    %56 = vmatpush1.xpose.msra.mxu0 %v53
    %57 = vmatprep.subr.mxu0 0.0
    %58 = vmatpush1.xpose.msra.mxu0 0.0
    %59 = vmatprep.subr.mxu0 0.0
    %60 = vmatpush1.xpose.msra.mxu0 0.0
    %61 = vmatprep.subr.mxu0 0.0
    %62 = vmatpush1.xpose.msra.mxu0 0.0
    %63 = vmatprep.subr.mxu0 0.0
    %64 = vmatpush1.xpose.msra.mxu0 0.0
    %65 = vmatprep.subr.mxu0 0.0
    %66 = vmatpush1.xpose.msra.mxu0 0.0
    %67 = vmatprep.subr.mxu0 0.0
    %68 = vmatpush1.xpose.msra.mxu0 0.0
    %69 = vmatprep.subr.mxu0 0.0
    %70 = vmatpush1.xpose.msra.mxu0 0.0
    %71 = vmatprep.subr.mxu0 0.0
    %72 = vmatpush1.xpose.msra.mxu0 0.0
    %73 = vmatprep.subr.mxu0 0.0
    %74 = vmatpush1.xpose.msra.mxu0 0.0
    %75 = vmatprep.subr.mxu0 0.0
    %76 = vmatpush1.xpose.msra.mxu0 0.0
    %77 = vmatprep.subr.mxu0 0.0
    %78 = vmatpush1.xpose.msra.mxu0 0.0
    %79 = vmatprep.subr.mxu0 0.0
    %80 = vmatpush1.xpose.msra.mxu0 0.0
    %81 = vmatprep.subr.mxu0 0.0
    %82 = vmatpush1.xpose.msra.mxu0 0.0
    %83 = vmatprep.subr.mxu0 0.0
    %84 = vmatpush1.xpose.msra.mxu0 0.0
    %85 = vmatprep.subr.mxu0 0.0
    %86 = vmatpush1.xpose.msra.mxu0 0.0
    %87 = vmatprep.subr.mxu0 0.0
    %88 = vmatpush1.xpose.msra.mxu0 0.0
    %89 = vmatprep.subr.mxu0 0.0
    %90 = vmatpush1.xpose.msra.mxu0 0.0
    %91 = vmatprep.subr.mxu0 0.0
    %92 = vmatpush1.xpose.msra.mxu0 0.0
    %93 = vmatprep.subr.mxu0 0.0
    %94 = vmatpush1.xpose.msra.mxu0 0.0
    %95 = vmatprep.subr.mxu0 0.0
    %96 = vmatpush1.xpose.msra.mxu0 0.0
    %97 = vmatprep.subr.mxu0 0.0
    %98 = vmatpush1.xpose.msra.mxu0 0.0
    %99 = vmatprep.subr.mxu0 0.0
    %100 = vmatpush1.xpose.msra.mxu0 0.0
    %101 = vmatprep.subr.mxu0 0.0
    %102 = vmatpush1.xpose.msra.mxu0 0.0
    %103 = vmatprep.subr.mxu0 0.0
    %104 = vmatpush1.xpose.msra.mxu0 0.0
    %105 = vmatprep.subr.mxu0 0.0
    %106 = vmatpush1.xpose.msra.mxu0 0.0
    %107 = vmatprep.subr.mxu0 0.0
    %108 = vmatpush1.xpose.msra.mxu0 0.0
    %109 = vmatprep.subr.mxu0 0.0
    %110 = vmatpush1.xpose.msra.mxu0 0.0
    %111 = vmatprep.subr.mxu0 0.0
    %112 = vmatpush1.xpose.msra.mxu0 0.0
    %113 = vmatprep.subr.mxu0 0.0
    %114 = vmatpush1.xpose.msra.mxu0 0.0
    %115 = vmatprep.subr.mxu0 0.0
    %116 = vmatpush1.xpose.msra.mxu0 0.0
    %117 = vmatprep.subr.mxu0 0.0
    %118 = vmatpush1.xpose.msra.mxu0 0.0
    %119 = vmatprep.mubr.f32.mxu0 0.0
    %120 = vmatmul.mubr.f32.gmra.mrb[0].mxu0 %v50
    %v121 = vpop.f32.mrb[0].mxu0
    %v122 = vadd.f32 %v46, %v121
    %v123 = vpop.f32.mrb[0].mxu0
    %124 = vdwg.mxu0
    %v125 = vsub.f32 0.0, %v122
    %v126 = vmul.f32 %v125, 1.442695
    %v127 = vpow.pop %v126
    %v128 = vadd.f32 %v127, 1.0
    %v129 = vrcp.pop %v128
    %vm130 = vcmask 64512
    %131 = vst.msk [vmem:[#allocation7] sm:$0xff] %vm130, %v129
    // Predicated region
    $region22: #{tpu_custom_call.1} parent=1 // pred_check
      _
    $region23: #{tpu_custom_call.1} parent=1 // pred_check_branch
      %133 = sbr.rel (0) target = $region25
    $region24: #{tpu_custom_call.1} parent=1 // pred_region
      %s135 = ssub.s32 128, 128
      %136 = vsyncadd [#allocation4], %s135
      %s138 = sshll.u32 [#allocation7], 4
      %s139 = int_to_ptr.vmem [resolvable:$true] %s138
      %141 = dma.vmem_to_hbm [thread:$0]  %s139, 128, %s3, [#allocation4]
    $region25: #{tpu_custom_call.1} parent=1 // pred_fallthru
      _
    // Predicated region
    $region26: #{tpu_custom_call.1} parent=1 // pred_check
      _
    $region27: #{tpu_custom_call.1} parent=1 // pred_check_branch
      %143 = sbr.rel (0) target = $region29
    $region28: #{tpu_custom_call.1} parent=1 // pred_region
      %144 = dma.done [#allocation4], 128
    $region29: #{tpu_custom_call.1} parent=1 // pred_fallthru
      _
    %145 = vsyncpa [#allocation3], 1
    %146 = vsyncpa [#allocation6], 1
    %147 = vsyncpa [#allocation4], 1

</llo_original>
